<compile_context>
chip_gen: v6e
topology: v6e:2x2x1
jax: 0.10.0
libtpu: 0.0.40
codegen_flags: <defaults>
</compile_context>

<pallas_src>
import math

import jax
import jax.numpy as jnp
from jax.experimental import pallas as pl
from jax.experimental.pallas import tpu as pltpu


def _gelu_tanh(x):
    # GELU with tanh approximation (matches torch.nn.GELU(approximate='tanh')).
    c = math.sqrt(2.0 / math.pi)
    return 0.5 * x * (1.0 + jnp.tanh(c * (x + 0.044715 * x * x * x)))


def _round_up(a, m):
    return (a + m - 1) // m * m


def _cdiv(a, b):
    return -(-a // b)


def _vmem_budget_bytes():
    """Per-generation VMEM budget with headroom for compiler-internal scratch."""
    cap = 64 << 20  # conservative fallback (v7x per-TC capacity)
    try:
        info = pltpu.get_tpu_info()
        cap = int(getattr(info, "vmem_capacity_bytes", cap)) or cap
    except Exception:
        pass
    # ~80%: ~51 MiB on v7x (64 MiB part), ~102 MiB on v5e/v6e (128 MiB parts).
    return max(32 << 20, int(cap * 0.80))


def _single_buffer_supported():
    """True if BlockSpec accepts pipeline_mode=pl.Buffered(1) at construction."""
    try:
        pl.BlockSpec((8, 128), lambda i: (0, 0), pipeline_mode=pl.Buffered(1))
        return True
    except Exception:
        return False


def _const_spec(block_shape, index_map, single_buffer):
    """BlockSpec for a grid-constant block; optionally single-buffered."""
    if single_buffer:
        return pl.BlockSpec(block_shape, index_map, pipeline_mode=pl.Buffered(1))
    return pl.BlockSpec(block_shape, index_map)


# --------------------------------------------------------------------------- #
# Kernels
# --------------------------------------------------------------------------- #

def mlp_kernel_resident(x_ref, wfc_ref, bfc_ref, wproj_ref, bproj_ref, o_ref):
    # Weights fully VMEM-resident: one fused pass per row tile, no reduction axis.
    # x_ref: (tm, D), wfc_ref: (D, H), bfc_ref: (1, H),
    # wproj_ref: (H, D), bproj_ref: (1, D), o_ref: (tm, D).
    x = x_ref[...]
    h = jnp.dot(x, wfc_ref[...], preferred_element_type=jnp.float32)
    h = h + bfc_ref[...].astype(jnp.float32)
    h = _gelu_tanh(h)
    y = jnp.dot(h.astype(wproj_ref.dtype), wproj_ref[...],
                preferred_element_type=jnp.float32)
    y = y + bproj_ref[...].astype(jnp.float32)
    o_ref[...] = y.astype(o_ref.dtype)


def mlp_kernel_streamed(x_ref, wfc_ref, bfc_ref, wproj_ref, bproj_ref, o_ref,
                        acc_ref):
    # Hidden dim tiled: grid = (row tiles, hidden tiles); f32 accumulator is
    # resident across the inner "arbitrary" hidden axis.
    # x_ref: (tm, D), wfc_ref: (D, th), bfc_ref: (1, th),
    # wproj_ref: (th, D), bproj_ref: (1, D), o_ref: (tm, D), acc_ref: (tm, D).
    j = pl.program_id(1)

    @pl.when(j == 0)
    def _init():
        acc_ref[...] = jnp.zeros_like(acc_ref)

    x = x_ref[...]
    h = jnp.dot(x, wfc_ref[...], preferred_element_type=jnp.float32)
    h = h + bfc_ref[...].astype(jnp.float32)
    h = _gelu_tanh(h)
    acc_ref[...] += jnp.dot(h.astype(wproj_ref.dtype), wproj_ref[...],
                            preferred_element_type=jnp.float32)

    @pl.when(j == pl.num_programs(1) - 1)
    def _finalize():
        y = acc_ref[...] + bproj_ref[...].astype(jnp.float32)
        o_ref[...] = y.astype(o_ref.dtype)


# --------------------------------------------------------------------------- #
# Wrapper
# --------------------------------------------------------------------------- #

def mlp_pallas(x, w_fc, b_fc, w_proj, b_proj, *, compute_dtype=jnp.bfloat16,
               tm_resident=256, tm_streamed=1024, th=512):
    """x: (B, T, D).  w_fc: (D, 4D), b_fc: (4D,), w_proj: (4D, D), b_proj: (D,).

    Weights/activations are cast to `compute_dtype` for the MXU; accumulation,
    GELU and bias adds are f32. Output dtype follows x.dtype.
    """
    B, T, D = x.shape
    H = w_fc.shape[1]
    out_dtype = x.dtype
    M = B * T

    cb = jnp.dtype(compute_dtype).itemsize
    ob = jnp.dtype(out_dtype).itemsize
    sub = 16 if jnp.dtype(compute_dtype) == jnp.dtype(jnp.bfloat16) else 8

    budget = _vmem_budget_bytes()

    x2 = x.reshape(M, D).astype(compute_dtype)
    wfc = w_fc.astype(compute_dtype)
    wproj = w_proj.astype(compute_dtype)
    bfc2 = b_fc.reshape(1, H).astype(jnp.float32)
    bproj2 = b_proj.reshape(1, D).astype(jnp.float32)

    cost = pl.CostEstimate(
        flops=4 * M * D * H,                       # two matmuls
        transcendentals=M * H,                     # tanh per hidden element
        bytes_accessed=(M * D * cb + 2 * D * H * cb + (H + D) * 4 + M * D * ob),
    )

    M_sub = _round_up(max(M, 1), sub)

    def _row_tiling(tm_req):
        tm_req = max(sub, _round_up(min(tm_req, M_sub), sub))
        n_tiles = max(1, _cdiv(M_sub, tm_req))
        # >=2 row tiles on the parallel axis so both v7x TensorCores get work.
        if n_tiles < 2 and M_sub >= 2 * sub:
            n_tiles = 2
        tm_eff = _round_up(_cdiv(M_sub, n_tiles), sub)
        n_tiles = _cdiv(M_sub, tm_eff)
        return tm_eff, n_tiles

    def _pad_rows(arr, rows):
        return jnp.pad(arr, ((0, rows - M), (0, 0))) if rows != M else arr

    def _finish(out2, m_pad):
        out2 = out2[:M] if m_pad != M else out2
        return out2.reshape(B, T, D)

    # -------------------- resident (weights fully in VMEM) -------------------
    tm_res, n_res = _row_tiling(tm_resident)

    def _resident_bytes(tm, wbuf):
        return (2 * tm * D * cb            # x tile (double-buffered)
                + 2 * tm * D * ob          # out tile (double-buffered)
                + wbuf * 2 * D * H * cb    # c_fc + c_proj weights
                + wbuf * (H + D) * 4       # biases (f32)
                + tm * H * 4               # GELU intermediate (f32)
                + tm * D * 4)              # f32 partials headroom

    single_ok = _single_buffer_supported()
    fits_double = _resident_bytes(tm_res, 2) <= budget
    fits_single = single_ok and _resident_bytes(tm_res, 1) <= budget
    use_resident = fits_double or fits_single
    single_buffer = (not fits_double) and fits_single

    def _call_resident(single_buf):
        m_pad = tm_res * n_res
        xin = _pad_rows(x2, m_pad)
        out2 = pl.pallas_call(
            mlp_kernel_resident,
            out_shape=jax.ShapeDtypeStruct((m_pad, D), out_dtype),
            grid_spec=pltpu.PrefetchScalarGridSpec(
                num_scalar_prefetch=0,
                grid=(n_res,),
                in_specs=[
                    pl.BlockSpec((tm_res, D), lambda i: (i, 0)),        # x rows
                    _const_spec((D, H), lambda i: (0, 0), single_buf),  # c_fc W
                    _const_spec((1, H), lambda i: (0, 0), single_buf),  # c_fc b
                    _const_spec((H, D), lambda i: (0, 0), single_buf),  # c_proj W
                    _const_spec((1, D), lambda i: (0, 0), single_buf),  # c_proj b
                ],
                out_specs=pl.BlockSpec((tm_res, D), lambda i: (i, 0)),
            ),
            compiler_params=pltpu.CompilerParams(
                dimension_semantics=("parallel",),
                vmem_limit_bytes=budget,
            ),
            cost_estimate=cost,
        )(xin, wfc, bfc2, wproj, bproj2)
        return _finish(out2, m_pad)

    # -------------------- streamed (hidden dim tiled) -------------------------
    def _pick_th(th_req):
        # Largest multiple of 128 that divides H and is <= th_req; else full H.
        best = None
        for cand in range(128, min(th_req, H) + 1, 128):
            if H % cand == 0:
                best = cand
        return best if best is not None else H

    def _streamed_bytes(tm, th_):
        return (2 * tm * D * cb + 2 * tm * D * ob
                + 2 * 2 * D * th_ * cb      # c_fc + c_proj weight tiles, dbl-buf
                + 2 * (th_ + D) * 4         # bias tiles
                + tm * D * 4                # f32 accumulator scratch
                + tm * th_ * 4)             # GELU intermediate (f32)

    def _call_streamed():
        th_eff = _pick_th(th)
        tm_eff, n_tiles = _row_tiling(tm_streamed)
        while _streamed_bytes(tm_eff, th_eff) > budget and tm_eff > sub:
            tm_eff = max(sub, _round_up(tm_eff // 2, sub))
            n_tiles = _cdiv(M_sub, tm_eff)
        m_pad = tm_eff * n_tiles
        xin = _pad_rows(x2, m_pad)
        out2 = pl.pallas_call(
            mlp_kernel_streamed,
            out_shape=jax.ShapeDtypeStruct((m_pad, D), out_dtype),
            grid_spec=pltpu.PrefetchScalarGridSpec(
                num_scalar_prefetch=0,
                grid=(n_tiles, H // th_eff),
                in_specs=[
                    pl.BlockSpec((tm_eff, D), lambda i, j: (i, 0)),    # x rows
                    pl.BlockSpec((D, th_eff), lambda i, j: (0, j)),    # c_fc W
                    pl.BlockSpec((1, th_eff), lambda i, j: (0, j)),    # c_fc b
                    pl.BlockSpec((th_eff, D), lambda i, j: (j, 0)),    # c_proj W
                    pl.BlockSpec((1, D), lambda i, j: (0, 0)),         # c_proj b
                ],
                out_specs=pl.BlockSpec((tm_eff, D), lambda i, j: (i, 0)),
                scratch_shapes=[pltpu.VMEM((tm_eff, D), jnp.float32)],
            ),
            compiler_params=pltpu.CompilerParams(
                dimension_semantics=("parallel", "arbitrary"),
                vmem_limit_bytes=budget,
            ),
            cost_estimate=cost,
        )(xin, wfc, bfc2, wproj, bproj2)
        return _finish(out2, m_pad)

    if use_resident:
        try:
            return _call_resident(single_buffer)
        except Exception:
            # Only swallow failures of the optional single-buffer (Buffered(1))
            # variant; everything else is a real error.
            if not single_buffer:
                raise
    return _call_streamed()


# TODO(synk): fp8 weight storage with per-channel scales (v7x-only MXU path)
# is not implemented; bf16 weights are used on all generations.


def mlp_reference(x, w_fc, b_fc, w_proj, b_proj):
    h = jnp.dot(x, w_fc) + b_fc
    h = _gelu_tanh(h)
    return jnp.dot(h, w_proj) + b_proj


if __name__ == "__main__":
    # Small GPT-2-like config: batch=2, seq=8, n_embd=32 -> hidden = 4*32 = 128.
    # (Real configs with D=768..1600 are lane-dense; this toy shape is for
    #  correctness only, not benchmarking.)
    B, T, D = 2, 8, 32
    H = 4 * D

    key = jax.random.PRNGKey(0)
    kx, k1, k2, k3, k4 = jax.random.split(key, 5)

    x = jax.random.normal(kx, (B, T, D), dtype=jnp.float32)

    # Deterministic init mimicking nn.Linear defaults (uniform +- 1/sqrt(fan_in)),
    # stored transposed as (in, out).
    bound_fc = 1.0 / math.sqrt(D)
    bound_proj = 1.0 / math.sqrt(H)
    w_fc = jax.random.uniform(k1, (D, H), jnp.float32, -bound_fc, bound_fc)
    b_fc = jax.random.uniform(k2, (H,), jnp.float32, -bound_fc, bound_fc)
    w_proj = jax.random.uniform(k3, (H, D), jnp.float32, -bound_proj, bound_proj)
    b_proj = jax.random.uniform(k4, (D,), jnp.float32, -bound_proj, bound_proj)

    ref = mlp_reference(x, w_fc, b_fc, w_proj, b_proj)

    # Full-precision path: tight check against the reference.
    out_f32 = jax.block_until_ready(
        mlp_pallas(x, w_fc, b_fc, w_proj, b_proj, compute_dtype=jnp.float32))
    assert out_f32.shape == (B, T, D)
    assert jnp.allclose(out_f32, ref, atol=1e-4, rtol=1e-4), "f32 mismatch vs reference"

    # bf16 MXU path (production default): loose check.
    out_bf16 = jax.block_until_ready(
        mlp_pallas(x, w_fc, b_fc, w_proj, b_proj, compute_dtype=jnp.bfloat16))
    assert out_bf16.shape == (B, T, D)
    assert bool(jnp.all(jnp.isfinite(out_bf16)))
    assert jnp.allclose(out_bf16, ref, atol=1e-1, rtol=1e-1), "bf16 mismatch vs reference"

    print("KERNEL_OK")
</pallas_src>

<mosaic_0001>
module attributes {stable_mosaic.version = 11 : i64} {
  func.func @mlp_kernel_resident(%arg0: i32, %arg1: memref<8x32xf32, #tpu.memory_space<vmem>>, %arg2: memref<32x128xf32, #tpu.memory_space<vmem>>, %arg3: memref<1x128xf32, #tpu.memory_space<vmem>>, %arg4: memref<128x32xf32, #tpu.memory_space<vmem>>, %arg5: memref<1x32xf32, #tpu.memory_space<vmem>>, %arg6: memref<8x32xf32, #tpu.memory_space<vmem>>) attributes {dimension_semantics = [#tpu.dimension_semantics<parallel>], iteration_bounds = array<i64: 2>, scalar_prefetch = 0 : i64, scratch_operands = 0 : i64, tpu.core_type = #tpu.core_type<tc>, window_params = [{transform_indices = @transform_0, window_bounds = array<i64: 8, 32>}, {pipeline_mode = #tpu.pipeline_mode<synchronous>, transform_indices = @transform_1, window_bounds = array<i64: 32, 128>}, {pipeline_mode = #tpu.pipeline_mode<synchronous>, transform_indices = @transform_2, window_bounds = array<i64: 1, 128>}, {pipeline_mode = #tpu.pipeline_mode<synchronous>, transform_indices = @transform_3, window_bounds = array<i64: 128, 32>}, {pipeline_mode = #tpu.pipeline_mode<synchronous>, transform_indices = @transform_4, window_bounds = array<i64: 1, 32>}, {transform_indices = @transform_5, window_bounds = array<i64: 8, 32>}]} {
    %c0 = arith.constant 0 : index
    %c0_0 = arith.constant 0 : index
    %0 = vector.load %arg1[%c0, %c0_0] : memref<8x32xf32, #tpu.memory_space<vmem>>, vector<8x32xf32>
    %c0_1 = arith.constant 0 : index
    %c0_2 = arith.constant 0 : index
    %1 = vector.load %arg2[%c0_1, %c0_2] : memref<32x128xf32, #tpu.memory_space<vmem>>, vector<32x128xf32>
    %cst = arith.constant dense<0.000000e+00> : vector<8x128xf32>
    %2 = tpu.matmul %0, %1, %cst {dimension_numbers = #tpu.dot_dimension_numbers<[1], [0], [0], [1], [0, 0, 1, 1], [], []>} : vector<8x32xf32>, vector<32x128xf32>, vector<8x128xf32> -> vector<8x128xf32>
    %c0_3 = arith.constant 0 : index
    %c0_4 = arith.constant 0 : index
    %3 = vector.load %arg3[%c0_3, %c0_4] : memref<1x128xf32, #tpu.memory_space<vmem>>, vector<1x128xf32>
    %4 = vector.broadcast %3 : vector<1x128xf32> to vector<8x128xf32>
    %5 = arith.addf %2, %4 : vector<8x128xf32>
    %cst_5 = arith.constant 5.000000e-01 : f32
    %6 = vector.broadcast %cst_5 : f32 to vector<8x128xf32>
    %7 = arith.mulf %6, %5 : vector<8x128xf32>
    %cst_6 = arith.constant 4.471500e-02 : f32
    %8 = vector.broadcast %cst_6 : f32 to vector<8x128xf32>
    %9 = arith.mulf %8, %5 : vector<8x128xf32>
    %10 = arith.mulf %9, %5 : vector<8x128xf32>
    %11 = arith.mulf %10, %5 : vector<8x128xf32>
    %12 = arith.addf %5, %11 : vector<8x128xf32>
    %cst_7 = arith.constant 0.797884583 : f32
    %13 = vector.broadcast %cst_7 : f32 to vector<8x128xf32>
    %14 = arith.mulf %13, %12 : vector<8x128xf32>
    %15 = math.tanh %14 : vector<8x128xf32>
    %cst_8 = arith.constant 1.000000e+00 : f32
    %16 = vector.broadcast %cst_8 : f32 to vector<8x128xf32>
    %17 = arith.addf %16, %15 : vector<8x128xf32>
    %18 = arith.mulf %7, %17 : vector<8x128xf32>
    %c0_9 = arith.constant 0 : index
    %c0_10 = arith.constant 0 : index
    %19 = vector.load %arg4[%c0_9, %c0_10] : memref<128x32xf32, #tpu.memory_space<vmem>>, vector<128x32xf32>
    %cst_11 = arith.constant dense<0.000000e+00> : vector<8x32xf32>
    %20 = tpu.matmul %18, %19, %cst_11 {dimension_numbers = #tpu.dot_dimension_numbers<[1], [0], [0], [1], [0, 0, 1, 1], [], []>} : vector<8x128xf32>, vector<128x32xf32>, vector<8x32xf32> -> vector<8x32xf32>
    %c0_12 = arith.constant 0 : index
    %c0_13 = arith.constant 0 : index
    %21 = vector.load %arg5[%c0_12, %c0_13] : memref<1x32xf32, #tpu.memory_space<vmem>>, vector<1x32xf32>
    %22 = vector.broadcast %21 : vector<1x32xf32> to vector<8x32xf32>
    %23 = arith.addf %20, %22 : vector<8x32xf32>
    %c0_14 = arith.constant 0 : index
    %c0_15 = arith.constant 0 : index
    %24 = vector.load %arg6[%c0_14, %c0_15] : memref<8x32xf32, #tpu.memory_space<vmem>>, vector<8x32xf32>
    tpu.vector_store %arg6[%c0_14, %c0_15], %23 {strides = array<i32>} : memref<8x32xf32, #tpu.memory_space<vmem>>, vector<8x32xf32>,
    return
  }
  func.func @transform_0(%arg0: i32) -> (i32, i32) {
    %c0_i32 = arith.constant 0 : i32
    %c0_i32_0 = arith.constant 0 : i32
    return %arg0, %c0_i32 : i32, i32
  }
  func.func @transform_1(%arg0: i32) -> (i32, i32) {
    %c0_i32 = arith.constant 0 : i32
    %c0_i32_0 = arith.constant 0 : i32
    %c0_i32_1 = arith.constant 0 : i32
    return %c0_i32, %c0_i32_0 : i32, i32
  }
  func.func @transform_2(%arg0: i32) -> (i32, i32) {
    %c0_i32 = arith.constant 0 : i32
    %c0_i32_0 = arith.constant 0 : i32
    %c0_i32_1 = arith.constant 0 : i32
    return %c0_i32, %c0_i32_0 : i32, i32
  }
  func.func @transform_3(%arg0: i32) -> (i32, i32) {
    %c0_i32 = arith.constant 0 : i32
    %c0_i32_0 = arith.constant 0 : i32
    %c0_i32_1 = arith.constant 0 : i32
    return %c0_i32, %c0_i32_0 : i32, i32
  }
  func.func @transform_4(%arg0: i32) -> (i32, i32) {
    %c0_i32 = arith.constant 0 : i32
    %c0_i32_0 = arith.constant 0 : i32
    %c0_i32_1 = arith.constant 0 : i32
    return %c0_i32, %c0_i32_0 : i32, i32
  }
  func.func @transform_5(%arg0: i32) -> (i32, i32) {
    %c0_i32 = arith.constant 0 : i32
    %c0_i32_0 = arith.constant 0 : i32
    return %arg0, %c0_i32 : i32, i32
  }
}

</mosaic_0001>

<llo_original>
// kernel: tpu_custom_call.1
$region0: #{tpu_custom_call.1}
  #allocation0 [shape = 'u32[]', space=smem, size = 0x4, offset = 0x4, fixed_abs, tag = 'smem constant byte address 0x4 - core index']
  #allocation1 [shape = 'u32[144,128]{1,0:T(1,128)}', space=vmem, size = 0x12000, scoped, tag = 'internal scratch']
  %s0 = inlined_call_operand.vmem [shape: f32[16,32], index: 0, kind: input, shape index: {}]
  %s1 = inlined_call_operand.vmem [shape: f32[32,128], index: 1, kind: input, shape index: {}]
  %s2 = inlined_call_operand.vmem [shape: f32[1,128], index: 2, kind: input, shape index: {}]
  %s3 = inlined_call_operand.vmem [shape: f32[128,32], index: 3, kind: input, shape index: {}]
  %s4 = inlined_call_operand.vmem [shape: f32[1,32], index: 4, kind: input, shape index: {}]
  %s5 = inlined_call_operand.hbm [shape: f32[16,32], index: 5, kind: output, shape index: {}]
  %s6 = sld [smem:[#allocation0]]
  $region53: #{tpu_custom_call.1} parent=0
    _
  %s8 = ssub.s32 1, %s6
  %s9 = scalar_select 0, %s8, %s6
  $region1: #{tpu_custom_call.1} parent=0
    #allocation2 [shape = 'u8[8192]{0}', space=vmem, size = 0x2000, scoped, tag = 'output window, operand 0']
    #allocation3 [shape = 's32[2]{0}', space=sflag, size = 0x8, scoped, tag = 'scoped memory for tpu_custom_call.1']
    %10 = vsyncpa [#allocation3], 0
    %s11 = scalar_lea.sflag [#allocation3], 1
    %12 = vsyncpa %s11, 0
    loop: start=0, step=1, limit=4
    $region2: #{tpu_custom_call.1} parent=1 // loop_pre_header
      _
    $region3: #{tpu_custom_call.1} parent=1 // loop_header
      %s14 = sphi 0, %s18
      %p15 = scmp.ge.s32.totalorder %s14, 4
      %s24 = sphi 0, %s26
      %s27 = sphi 0, %s24
      %s28 = sphi 0, %s27
      %s44 = sphi 0, %s28
      %s48 = sphi 0, %s48
      %s50 = sphi 0, %s48
      %s51 = sphi 0, %s50
      %s65 = sphi 0, %s51
      %s69 = sphi 0, %s69
      %s71 = sphi 0, %s69
      %s72 = sphi 0, %s71
      %s86 = sphi 0, %s72
      %s90 = sphi 0, %s90
      %s92 = sphi 0, %s90
      %s93 = sphi 0, %s92
      %s107 = sphi 0, %s93
      %s111 = sphi 0, %s111
      %s113 = sphi 0, %s111
      %s114 = sphi 0, %s113
      %s128 = sphi 0, %s114
      %s134 = sphi 0, %s136
      %s137 = sphi 0, %s134
      %s138 = sphi 0, %s137
      %s154 = sphi 0, %s138
    $region4: #{tpu_custom_call.1} parent=1 // loop_header_branch
      %17 = sbr.rel (%p15) target = $region8
    $region5: #{tpu_custom_call.1} parent=1 // loop_body
      %s19 = ssub.s32 %s14, 1
      %s20 = ssub.s32 %s14, 2
      %s21 = sadd.s32 %s14, 1
      %s22 = ssub.s32 %s14, %s21
      %p23 = scmp.eq.s32.totalorder %s22, 0
      %s25 = sadd.s32 %s24, 1
      %s26 = scalar_select %p23, %s24, %s25
      %p29 = pneg %p23
      %p30 = scmp.eq.s32.totalorder %s14, 1
      %p31 = por %p29, %p30
      %p32 = scmp.ne.s32.totalorder %s24, %s27
      %p33 = scmp.eq.s32.totalorder %s14, 0
      %p34 = por %p32, %p33
      %p35 = scmp.ne.s32.totalorder %s24, %s27
      %p36 = scmp.eq.s32.totalorder %s19, 1
      %p37 = por %p35, %p36
      %p38 = scmp.ne.s32.totalorder %s27, %s28
      %p39 = scmp.eq.s32.totalorder %s19, 0
      %p40 = por %p38, %p39
      %p41 = scmp.ne.s32.totalorder %s27, %s28
      %p42 = scmp.eq.s32.totalorder %s20, 1
      %p43 = por %p41, %p42
      %p45 = scmp.ne.s32.totalorder %s28, %s44
      %p46 = scmp.eq.s32.totalorder %s20, 0
      %p47 = por %p45, %p46
      %s49 = sadd.s32 %s48, 1
      %p52 = scmp.eq.s32.totalorder %s14, 1
      %p53 = scmp.ne.s32.totalorder %s48, %s50
      %p54 = scmp.eq.s32.totalorder %s14, 0
      %p55 = por %p53, %p54
      %p56 = scmp.ne.s32.totalorder %s48, %s50
      %p57 = scmp.eq.s32.totalorder %s19, 1
      %p58 = por %p56, %p57
      %p59 = scmp.ne.s32.totalorder %s50, %s51
      %p60 = scmp.eq.s32.totalorder %s19, 0
      %p61 = por %p59, %p60
      %p62 = scmp.ne.s32.totalorder %s50, %s51
      %p63 = scmp.eq.s32.totalorder %s20, 1
      %p64 = por %p62, %p63
      %p66 = scmp.ne.s32.totalorder %s51, %s65
      %p67 = scmp.eq.s32.totalorder %s20, 0
      %p68 = por %p66, %p67
      %s70 = sadd.s32 %s69, 1
      %p73 = scmp.eq.s32.totalorder %s14, 1
      %p74 = scmp.ne.s32.totalorder %s69, %s71
      %p75 = scmp.eq.s32.totalorder %s14, 0
      %p76 = por %p74, %p75
      %p77 = scmp.ne.s32.totalorder %s69, %s71
      %p78 = scmp.eq.s32.totalorder %s19, 1
      %p79 = por %p77, %p78
      %p80 = scmp.ne.s32.totalorder %s71, %s72
      %p81 = scmp.eq.s32.totalorder %s19, 0
      %p82 = por %p80, %p81
      %p83 = scmp.ne.s32.totalorder %s71, %s72
      %p84 = scmp.eq.s32.totalorder %s20, 1
      %p85 = por %p83, %p84
      %p87 = scmp.ne.s32.totalorder %s72, %s86
      %p88 = scmp.eq.s32.totalorder %s20, 0
      %p89 = por %p87, %p88
      %s91 = sadd.s32 %s90, 1
      %p94 = scmp.eq.s32.totalorder %s14, 1
      %p95 = scmp.ne.s32.totalorder %s90, %s92
      %p96 = scmp.eq.s32.totalorder %s14, 0
      %p97 = por %p95, %p96
      %p98 = scmp.ne.s32.totalorder %s90, %s92
      %p99 = scmp.eq.s32.totalorder %s19, 1
      %p100 = por %p98, %p99
      %p101 = scmp.ne.s32.totalorder %s92, %s93
      %p102 = scmp.eq.s32.totalorder %s19, 0
      %p103 = por %p101, %p102
      %p104 = scmp.ne.s32.totalorder %s92, %s93
      %p105 = scmp.eq.s32.totalorder %s20, 1
      %p106 = por %p104, %p105
      %p108 = scmp.ne.s32.totalorder %s93, %s107
      %p109 = scmp.eq.s32.totalorder %s20, 0
      %p110 = por %p108, %p109
      %s112 = sadd.s32 %s111, 1
      %p115 = scmp.eq.s32.totalorder %s14, 1
      %p116 = scmp.ne.s32.totalorder %s111, %s113
      %p117 = scmp.eq.s32.totalorder %s14, 0
      %p118 = por %p116, %p117
      %p119 = scmp.ne.s32.totalorder %s111, %s113
      %p120 = scmp.eq.s32.totalorder %s19, 1
      %p121 = por %p119, %p120
      %p122 = scmp.ne.s32.totalorder %s113, %s114
      %p123 = scmp.eq.s32.totalorder %s19, 0
      %p124 = por %p122, %p123
      %p125 = scmp.ne.s32.totalorder %s113, %s114
      %p126 = scmp.eq.s32.totalorder %s20, 1
      %p127 = por %p125, %p126
      %p129 = scmp.ne.s32.totalorder %s114, %s128
      %p130 = scmp.eq.s32.totalorder %s20, 0
      %p131 = por %p129, %p130
      %s132 = ssub.s32 %s14, %s21
      %p133 = scmp.eq.s32.totalorder %s132, 0
      %s135 = sadd.s32 %s134, 1
      %s136 = scalar_select %p133, %s134, %s135
      %p139 = pneg %p133
      %p140 = scmp.eq.s32.totalorder %s14, 1
      %p141 = por %p139, %p140
      %p142 = scmp.ne.s32.totalorder %s134, %s137
      %p143 = scmp.eq.s32.totalorder %s14, 0
      %p144 = por %p142, %p143
      %p145 = scmp.ne.s32.totalorder %s134, %s137
      %p146 = scmp.eq.s32.totalorder %s19, 1
      %p147 = por %p145, %p146
      %p148 = scmp.ne.s32.totalorder %s137, %s138
      %p149 = scmp.eq.s32.totalorder %s19, 0
      %p150 = por %p148, %p149
      %p151 = scmp.ne.s32.totalorder %s137, %s138
      %p152 = scmp.eq.s32.totalorder %s20, 1
      %p153 = por %p151, %p152
      %p155 = scmp.ne.s32.totalorder %s138, %s154
      %p156 = scmp.eq.s32.totalorder %s20, 0
      %p157 = por %p155, %p156
      %p158 = scmp.le.s32.totalorder 1, %s14
      %p159 = scmp.lt.s32.totalorder %s14, 3
      %p160 = pnand %p158, %p159
      %p161 = pneg %p160
      // Predicated region
      $region9: #{tpu_custom_call.1} parent=5 // pred_check
        _
      $region10: #{tpu_custom_call.1} parent=5 // pred_check_branch
        %163 = sbr.rel (%p160) target = $region12
      $region11: #{tpu_custom_call.1} parent=5 // pred_region
        %s164 = ssub.s32 %s14, 1
        // Predicated region
        $region13: #{tpu_custom_call.1} parent=11 // pred_check
          %p165 = pneg %p61
        $region14: #{tpu_custom_call.1} parent=11 // pred_check_branch
          %167 = sbr.rel (%p165) target = $region16
        $region15: #{tpu_custom_call.1} parent=11 // pred_region
          _
        $region16: #{tpu_custom_call.1} parent=11 // pred_fallthru
          _
        // Predicated region
        $region17: #{tpu_custom_call.1} parent=11 // pred_check
          %p168 = pneg %p82
        $region18: #{tpu_custom_call.1} parent=11 // pred_check_branch
          %170 = sbr.rel (%p168) target = $region20
        $region19: #{tpu_custom_call.1} parent=11 // pred_region
          _
        $region20: #{tpu_custom_call.1} parent=11 // pred_fallthru
          _
        // Predicated region
        $region21: #{tpu_custom_call.1} parent=11 // pred_check
          %p171 = pneg %p103
        $region22: #{tpu_custom_call.1} parent=11 // pred_check_branch
          %173 = sbr.rel (%p171) target = $region24
        $region23: #{tpu_custom_call.1} parent=11 // pred_region
          _
        $region24: #{tpu_custom_call.1} parent=11 // pred_fallthru
          _
        // Predicated region
        $region25: #{tpu_custom_call.1} parent=11 // pred_check
          %p174 = pneg %p124
        $region26: #{tpu_custom_call.1} parent=11 // pred_check_branch
          %176 = sbr.rel (%p174) target = $region28
        $region27: #{tpu_custom_call.1} parent=11 // pred_region
          _
        $region28: #{tpu_custom_call.1} parent=11 // pred_fallthru
          _
      $region12: #{tpu_custom_call.1} parent=5 // pred_fallthru
        _
      %p177 = scmp.lt.s32.totalorder %s14, 2
      // Predicated region
      $region29: #{tpu_custom_call.1} parent=5 // pred_check
        %p178 = pneg %p177
      $region30: #{tpu_custom_call.1} parent=5 // pred_check_branch
        %180 = sbr.rel (%p178) target = $region32
      $region31: #{tpu_custom_call.1} parent=5 // pred_region
        // Predicated region
        $region33: #{tpu_custom_call.1} parent=31 // pred_check
          %p181 = pneg %p34
        $region34: #{tpu_custom_call.1} parent=31 // pred_check_branch
          %183 = sbr.rel (%p181) target = $region36
        $region35: #{tpu_custom_call.1} parent=31 // pred_region
          %p184 = scmp.lt.s32.totalorder %s14, 1
          %s185 = scalar_select %p184, %s14, 1
          %s186 = smul.addr %s185, 8
          %s187 = scalar_lea.vmem %s0, %s186
        $region36: #{tpu_custom_call.1} parent=31 // pred_fallthru
          _
      $region32: #{tpu_custom_call.1} parent=5 // pred_fallthru
        _
      %p188 = scmp.le.s32.totalorder 1, %s14
      %p189 = scmp.lt.s32.totalorder %s14, 3
      %p190 = pnand %p188, %p189
      %p191 = pneg %p190
      // Predicated region
      $region37: #{tpu_custom_call.1} parent=5 // pred_check
        _
      $region38: #{tpu_custom_call.1} parent=5 // pred_check_branch
        %193 = sbr.rel (%p190) target = $region40
      $region39: #{tpu_custom_call.1} parent=5 // pred_region
        %s194 = ssub.s32 %s14, 1
        %p195 = scmp.lt.s32.totalorder %s19, 1
        %s196 = scalar_select %p195, %s19, 1
        %s197 = smul.addr %s196, 8
        %s198 = scalar_lea.vmem %s0, %s197
        %p199 = pneg %p40
        %p200 = pneg %p37
        %p201 = pneg %p61
        %p202 = pneg %p58
        %p203 = pneg %p82
        %p204 = pneg %p79
        %p205 = pneg %p103
        %p206 = pneg %p100
        %p207 = pneg %p124
        %p208 = pneg %p121
        %p209 = pneg %p150
        %p210 = pneg %p147
        %s211 = sand.u32 %s137, 1
        %s212 = scalar_lea.sflag [#allocation3], %s211
        %s213 = sand.u32 %s137, 1
        %s214 = smul.addr %s213, 8
        %s215 = scalar_lea.vmem [#allocation2], %s214
        %p216 = scmp.lt.s32.totalorder %s19, 1
        %s217 = scalar_select %p216, %s19, 1
        %s218 = smul.addr %s217, 8
        %s219 = scalar_lea.vmem %s0, %s218
        %v220 = vld [vmem:[%s219] sm:$0xff]
        %v221 = vld [vmem:[%s1] sm:$0xff]
        %v222 = vld [vmem:[%s1 + $0x8] sm:$0xff]
        %v223 = vld [vmem:[%s1 + $0x10] sm:$0xff]
        %v224 = vld [vmem:[%s1 + $0x18] sm:$0xff]
        %v225 = vld [vmem:[%s2] sm:$0x1]
        %v227 = vlaneseq
        %v228 = vshrl.u32 %v227, 7
        %v229 = vsub.s32 0, %v228
        %v230 = vrot.slane %v225, %v229
        %vm232 = vcmask 261120
        %v234 = vsel %vm232, %v220, 0
        %236 = vmatprep.subr.mxu0 0.0
        %237 = vmatpush1.msra.mxu0 0.0
        %238 = vmatprep.subr.mxu0 0.0
        %239 = vmatpush1.msra.mxu0 0.0
        %240 = vmatprep.subr.mxu0 0.0
        %241 = vmatpush1.msra.mxu0 0.0
        %242 = vmatprep.subr.mxu0 0.0
        %243 = vmatpush1.msra.mxu0 0.0
        %244 = vmatprep.subr.mxu0 0.0
        %245 = vmatpush1.msra.mxu0 0.0
        %246 = vmatprep.subr.mxu0 0.0
        %247 = vmatpush1.msra.mxu0 0.0
        %248 = vmatprep.subr.mxu0 0.0
        %249 = vmatpush1.msra.mxu0 0.0
        %250 = vmatprep.subr.mxu0 0.0
        %251 = vmatpush1.msra.mxu0 0.0
        %252 = vmatprep.subr.mxu0 0.0
        %253 = vmatpush1.msra.mxu0 0.0
        %254 = vmatprep.subr.mxu0 0.0
        %255 = vmatpush1.msra.mxu0 0.0
        %256 = vmatprep.subr.mxu0 0.0
        %257 = vmatpush1.msra.mxu0 0.0
        %258 = vmatprep.subr.mxu0 0.0
        %259 = vmatpush1.msra.mxu0 0.0
        %260 = vmatprep.subr.mxu0 0.0
        %261 = vmatpush1.msra.mxu0 %v224
        %262 = vmatprep.subr.mxu0 0.0
        %263 = vmatpush1.msra.mxu0 %v223
        %264 = vmatprep.subr.mxu0 0.0
        %265 = vmatpush1.msra.mxu0 %v222
        %266 = vmatprep.subr.mxu0 0.0
        %267 = vmatpush1.msra.mxu0 %v221
        %268 = vmatprep.subr.mxu0 0.0
        %269 = vmatpush2.msra.mxu0 0.0
        %270 = vmatprep.subr.mxu0 0.0
        %271 = vmatpush2.msra.mxu0 0.0
        %272 = vmatprep.subr.mxu0 0.0
        %273 = vmatpush2.msra.mxu0 0.0
        %274 = vmatprep.subr.mxu0 0.0
        %275 = vmatpush2.msra.mxu0 0.0
        %276 = vmatprep.subr.mxu0 0.0
        %277 = vmatpush2.msra.mxu0 0.0
        %278 = vmatprep.subr.mxu0 0.0
        %279 = vmatpush2.msra.mxu0 0.0
        %280 = vmatprep.subr.mxu0 0.0
        %281 = vmatpush2.msra.mxu0 0.0
        %282 = vmatprep.subr.mxu0 0.0
        %283 = vmatpush2.msra.mxu0 0.0
        %284 = vmatprep.subr.mxu0 0.0
        %285 = vmatpush2.msra.mxu0 0.0
        %286 = vmatprep.subr.mxu0 0.0
        %287 = vmatpush2.msra.mxu0 0.0
        %288 = vmatprep.subr.mxu0 0.0
        %289 = vmatpush2.msra.mxu0 0.0
        %290 = vmatprep.subr.mxu0 0.0
        %291 = vmatpush2.msra.mxu0 0.0
        %292 = vmatprep.subr.mxu0 0.0
        %293 = vmatpush2.msra.mxu0 0.0
        %294 = vmatprep.subr.mxu0 0.0
        %295 = vmatpush2.msra.mxu0 0.0
        %296 = vmatprep.subr.mxu0 0.0
        %297 = vmatpush2.msra.mxu0 0.0
        %298 = vmatprep.subr.mxu0 0.0
        %299 = vmatpush2.msra.mxu0 0.0
        %300 = vmatprep.mubr.f32.mxu0 0.0
        %301 = vmatmul.mubr.f32.gmra.mxu0 %v234
        %v302 = vpop.f32.mrf.mxu0
        %v303 = vadd.f32 %v230, %v302
        %v304 = vpop.f32.mrf.mxu0
        %305 = vdwg.mxu0
        %v306 = vmul.f32 %v303, 0.5
        %v307 = vmul.f32 %v303, 0.044715
        %v308 = vmul.f32 %v307, %v303
        %v309 = vmul.f32 %v308, %v303
        %v310 = vadd.f32 %v303, %v309
        %v311 = vmul.f32 %v310, 0.7978846
        %v312 = vtanh.pop %v311
        %v313 = vadd.f32 %v312, 1.0
        %v314 = vmul.f32 %v306, %v313
        %v315 = vld [vmem:[%s3] sm:$0xff]
        %v316 = vld [vmem:[%s3 + $0x8] sm:$0xff]
        %v317 = vld [vmem:[%s3 + $0x10] sm:$0xff]
        %v318 = vld [vmem:[%s3 + $0x18] sm:$0xff]
        %v319 = vld [vmem:[%s3 + $0x20] sm:$0xff]
        %v320 = vld [vmem:[%s3 + $0x28] sm:$0xff]
        %v321 = vld [vmem:[%s3 + $0x30] sm:$0xff]
        %v322 = vld [vmem:[%s3 + $0x38] sm:$0xff]
        %v323 = vld [vmem:[%s3 + $0x40] sm:$0xff]
        %v324 = vld [vmem:[%s3 + $0x48] sm:$0xff]
        %v325 = vld [vmem:[%s3 + $0x50] sm:$0xff]
        %v326 = vld [vmem:[%s3 + $0x58] sm:$0xff]
        %v327 = vld [vmem:[%s3 + $0x60] sm:$0xff]
        %v328 = vld [vmem:[%s3 + $0x68] sm:$0xff]
        %v329 = vld [vmem:[%s3 + $0x70] sm:$0xff]
        %v330 = vld [vmem:[%s3 + $0x78] sm:$0xff]
        %v331 = vld [vmem:[%s4] sm:$0x1]
        %v333 = vlaneseq
        %v334 = vshrl.u32 %v333, 7
        %v335 = vsub.s32 0, %v334
        %v336 = vrot.slane %v331, %v335
        %338 = vmatprep.subr.mxu0 0.0
        %339 = vmatpush1.msra.mxu0 %v330
        %340 = vmatprep.subr.mxu0 0.0
        %341 = vmatpush1.msra.mxu0 %v329
        %342 = vmatprep.subr.mxu0 0.0
        %343 = vmatpush1.msra.mxu0 %v328
        %344 = vmatprep.subr.mxu0 0.0
        %345 = vmatpush1.msra.mxu0 %v327
        %346 = vmatprep.subr.mxu0 0.0
        %347 = vmatpush1.msra.mxu0 %v326
        %348 = vmatprep.subr.mxu0 0.0
        %349 = vmatpush1.msra.mxu0 %v325
        %350 = vmatprep.subr.mxu0 0.0
        %351 = vmatpush1.msra.mxu0 %v324
        %352 = vmatprep.subr.mxu0 0.0
        %353 = vmatpush1.msra.mxu0 %v323
        %354 = vmatprep.subr.mxu0 0.0
        %355 = vmatpush1.msra.mxu0 %v322
        %356 = vmatprep.subr.mxu0 0.0
        %357 = vmatpush1.msra.mxu0 %v321
        %358 = vmatprep.subr.mxu0 0.0
        %359 = vmatpush1.msra.mxu0 %v320
        %360 = vmatprep.subr.mxu0 0.0
        %361 = vmatpush1.msra.mxu0 %v319
        %362 = vmatprep.subr.mxu0 0.0
        %363 = vmatpush1.msra.mxu0 %v318
        %364 = vmatprep.subr.mxu0 0.0
        %365 = vmatpush1.msra.mxu0 %v317
        %366 = vmatprep.subr.mxu0 0.0
        %367 = vmatpush1.msra.mxu0 %v316
        %368 = vmatprep.subr.mxu0 0.0
        %369 = vmatpush1.msra.mxu0 %v315
        %370 = vmatprep.subr.mxu0 0.0
        %371 = vmatpush2.msra.mxu0 0.0
        %372 = vmatprep.subr.mxu0 0.0
        %373 = vmatpush2.msra.mxu0 0.0
        %374 = vmatprep.subr.mxu0 0.0
        %375 = vmatpush2.msra.mxu0 0.0
        %376 = vmatprep.subr.mxu0 0.0
        %377 = vmatpush2.msra.mxu0 0.0
        %378 = vmatprep.subr.mxu0 0.0
        %379 = vmatpush2.msra.mxu0 0.0
        %380 = vmatprep.subr.mxu0 0.0
        %381 = vmatpush2.msra.mxu0 0.0
        %382 = vmatprep.subr.mxu0 0.0
        %383 = vmatpush2.msra.mxu0 0.0
        %384 = vmatprep.subr.mxu0 0.0
        %385 = vmatpush2.msra.mxu0 0.0
        %386 = vmatprep.subr.mxu0 0.0
        %387 = vmatpush2.msra.mxu0 0.0
        %388 = vmatprep.subr.mxu0 0.0
        %389 = vmatpush2.msra.mxu0 0.0
        %390 = vmatprep.subr.mxu0 0.0
        %391 = vmatpush2.msra.mxu0 0.0
        %392 = vmatprep.subr.mxu0 0.0
        %393 = vmatpush2.msra.mxu0 0.0
        %394 = vmatprep.subr.mxu0 0.0
        %395 = vmatpush2.msra.mxu0 0.0
        %396 = vmatprep.subr.mxu0 0.0
        %397 = vmatpush2.msra.mxu0 0.0
        %398 = vmatprep.subr.mxu0 0.0
        %399 = vmatpush2.msra.mxu0 0.0
        %400 = vmatprep.subr.mxu0 0.0
        %401 = vmatpush2.msra.mxu0 0.0
        %402 = vmatprep.mubr.f32.mxu0 0.0
        %403 = vmatmul.mubr.f32.gmra.mxu0 %v314
        %v404 = vpop.f32.mrf.mxu0
        %v405 = vadd.f32 %v336, %v404
        %v406 = vpop.f32.mrf.mxu0
        %407 = vdwg.mxu0
        %408 = vst.msk [vmem:[%s215] sm:$0xff] %vm232, %v405
        %s409 = sand.u32 %s137, 1
        %s410 = scalar_lea.sflag [#allocation3], %s409
        %s411 = sand.u32 %s137, 1
        %s412 = smul.addr %s411, 8
        %s413 = scalar_lea.vmem [#allocation2], %s412
        // Predicated region
        $region41: #{tpu_custom_call.1} parent=39 // pred_check
          %p414 = pneg %p147
        $region42: #{tpu_custom_call.1} parent=39 // pred_check_branch
          %416 = sbr.rel (%p414) target = $region44
        $region43: #{tpu_custom_call.1} parent=39 // pred_region
          %s418 = ssub.s32 128, 128
          %419 = vsyncadd %s410, %s418
          %s420 = smul.addr %s19, 128
          %s421 = scalar_lea.hbm %s5, %s420
          %s423 = sshll.u32 %s413, 4
          %s424 = int_to_ptr.vmem [resolvable:$true] %s423
          %426 = dma.vmem_to_hbm [thread:$0]  %s424, 128, %s421, %s410
        $region44: #{tpu_custom_call.1} parent=39 // pred_fallthru
          _
      $region40: #{tpu_custom_call.1} parent=5 // pred_fallthru
        _
      %p427 = scmp.le.s32.totalorder 2, %s14
      // Predicated region
      $region45: #{tpu_custom_call.1} parent=5 // pred_check
        %p428 = pneg %p427
      $region46: #{tpu_custom_call.1} parent=5 // pred_check_branch
        %430 = sbr.rel (%p428) target = $region48
      $region47: #{tpu_custom_call.1} parent=5 // pred_region
        %s431 = ssub.s32 %s14, 2
        // Predicated region
        $region49: #{tpu_custom_call.1} parent=47 // pred_check
          %p432 = pneg %p153
        $region50: #{tpu_custom_call.1} parent=47 // pred_check_branch
          %434 = sbr.rel (%p432) target = $region52
        $region51: #{tpu_custom_call.1} parent=47 // pred_region
          %s435 = sand.u32 %s138, 1
          %s436 = scalar_lea.sflag [#allocation3], %s435
          %s437 = sand.u32 %s138, 1
          %s438 = smul.addr %s437, 8
          %s439 = scalar_lea.vmem [#allocation2], %s438
          %440 = dma.done %s436, 128
        $region52: #{tpu_custom_call.1} parent=47 // pred_fallthru
          _
      $region48: #{tpu_custom_call.1} parent=5 // pred_fallthru
        _
    $region6: #{tpu_custom_call.1} parent=1 // loop_footer
      %s18 = sadd.s32 1, %s14
    $region7: #{tpu_custom_call.1} parent=1 // loop_footer_branch
      %13 = sbr.rel target = $region3
    $region8: #{tpu_custom_call.1} parent=1 // loop_exit
      _
    %441 = vsyncpa [#allocation3], 1
    %s442 = scalar_lea.sflag [#allocation3], 1
    %443 = vsyncpa %s442, 1

</llo_original>
